<compile_context>
chip_gen: v7x
topology: tpu7x:2x2x1
jax: 0.10.0
libtpu: 0.0.40
codegen_flags: <defaults>
</compile_context>

<pallas_src>
import functools

import jax
import jax.numpy as jnp
from jax import lax
from jax.experimental import pallas as pl
from jax.experimental.pallas import tpu as pltpu


def _round_up(x, m):
    return ((x + m - 1) // m) * m


def _intervention_kernel(base_ref, source_ref, w_ref, out_ref):
    base = base_ref[...]                          # [tm, embed_dim]
    diff = source_ref[...] - base                 # VPU elementwise
    w = w_ref[...]                                # [embed_dim, proj_dim] (VMEM-resident)

    # rot = diff @ W  -> [tm, proj_dim], f32 accumulation on the MXU.
    rot = jnp.dot(diff, w, preferred_element_type=jnp.float32)

    # delta = rot @ W.T without materializing W.T: contract the proj axis of
    # both operands so W is fed to the MXU directly as the stationary operand.
    delta = lax.dot_general(
        rot, w,
        dimension_numbers=(((1,), (1,)), ((), ())),
        preferred_element_type=jnp.float32)       # [tm, embed_dim]

    out_ref[...] = (base.astype(jnp.float32) + delta).astype(out_ref.dtype)


def low_rank_rotated_space_intervention(base, source, weight, *, tile_rows=256):
    """base, source: [..., embed_dim]; weight: [embed_dim, proj_dim] (orthonormal cols).

    Returns base + (source @ W - base @ W) @ W.T, same dtype/shape as base.
    """
    orig_shape = base.shape
    embed_dim = orig_shape[-1]
    assert source.shape == base.shape
    assert weight.shape[0] == embed_dim
    proj_dim = weight.shape[1]

    base2 = base.reshape(-1, embed_dim)
    source2 = source.reshape(-1, embed_dim)
    n_rows = base2.shape[0]

    # --- tile selection (keep sublane multiple of 8; shrink for tiny N). ---
    tm = min(int(tile_rows), _round_up(n_rows, 8))
    tm = _round_up(tm, 8)
    n_pad = _round_up(n_rows, tm)
    if n_pad != n_rows:
        pad = n_pad - n_rows
        base2 = jnp.pad(base2, ((0, pad), (0, 0)))
        source2 = jnp.pad(source2, ((0, pad), (0, 0)))

    # --- zero-pad proj_dim up to a lane-dense multiple of 128 (no math change:
    #     padded columns are zero so they contribute nothing to delta). ---
    proj_pad = _round_up(proj_dim, 128)
    w = weight if proj_pad == proj_dim else jnp.pad(weight, ((0, 0), (0, proj_pad - proj_dim)))

    grid = (n_pad // tm,)

    # --- VMEM budget hint: double-buffered in/out tiles + W + f32 intermediates.
    dsize = jnp.dtype(base.dtype).itemsize
    tile_bytes = tm * embed_dim * dsize
    w_bytes = embed_dim * proj_pad * jnp.dtype(w.dtype).itemsize
    interm_bytes = tm * (proj_pad + embed_dim) * 4
    needed = 6 * tile_bytes + 2 * w_bytes + 2 * interm_bytes
    vmem_limit = int(min(max(needed * 3 // 2, 32 * 1024 * 1024), 64 * 1024 * 1024))

    cost = pl.CostEstimate(
        flops=4 * n_pad * embed_dim * proj_pad,
        transcendentals=0,
        bytes_accessed=3 * n_pad * embed_dim * dsize + w_bytes,
    )

    out = pl.pallas_call(
        _intervention_kernel,
        out_shape=jax.ShapeDtypeStruct((n_pad, embed_dim), base.dtype),
        grid_spec=pltpu.PrefetchScalarGridSpec(
            num_scalar_prefetch=0,
            grid=grid,
            in_specs=[
                pl.BlockSpec((tm, embed_dim), lambda i: (i, 0)),
                pl.BlockSpec((tm, embed_dim), lambda i: (i, 0)),
                pl.BlockSpec(w.shape, lambda i: (0, 0)),
            ],
            out_specs=pl.BlockSpec((tm, embed_dim), lambda i: (i, 0)),
        ),
        compiler_params=pltpu.CompilerParams(
            dimension_semantics=("parallel",),
            vmem_limit_bytes=vmem_limit,
        ),
        cost_estimate=cost,
    )(base2, source2, w)

    return out[:n_rows].reshape(orig_shape)


def make_orthogonal_weight(key, embed_dim, proj_dim, dtype=jnp.float32):
    # Deterministic orthonormal columns (mimics torch orthogonal parametrization).
    a = jax.random.normal(key, (embed_dim, proj_dim), dtype=jnp.float32)
    q, _ = jnp.linalg.qr(a)
    return q.astype(dtype)


if __name__ == "__main__":
    key = jax.random.PRNGKey(0)
    k_base, k_src, k_w = jax.random.split(key, 3)

    # Small shapes consistent with the module: [batch, seq, embed_dim] activations.
    batch, seq, embed_dim, proj_dim = 2, 8, 32, 8

    base = jax.random.normal(k_base, (batch, seq, embed_dim), dtype=jnp.float32)
    source = jax.random.normal(k_src, (batch, seq, embed_dim), dtype=jnp.float32)
    weight = make_orthogonal_weight(k_w, embed_dim, proj_dim)

    fn = jax.jit(functools.partial(low_rank_rotated_space_intervention, tile_rows=256))
    out = jax.block_until_ready(fn(base, source, weight))

    # Reference check in plain JAX (same math as the PyTorch else-branch).
    ref = base + (source @ weight - base @ weight) @ weight.T
    assert out.shape == base.shape and out.dtype == base.dtype
    assert jnp.allclose(out, ref, atol=1e-5, rtol=1e-5), "mismatch vs reference"

    print("KERNEL_OK")
</pallas_src>

<mosaic_0001>
module attributes {stable_mosaic.version = 11 : i64} {
  func.func @_intervention_kernel(%arg0: i32, %arg1: memref<16x32xf32, #tpu.memory_space<vmem>>, %arg2: memref<16x32xf32, #tpu.memory_space<vmem>>, %arg3: memref<32x128xf32, #tpu.memory_space<vmem>>, %arg4: memref<16x32xf32, #tpu.memory_space<vmem>>) attributes {dimension_semantics = [#tpu.dimension_semantics<parallel>], iteration_bounds = array<i64: 1>, scalar_prefetch = 0 : i64, scratch_operands = 0 : i64, tpu.core_type = #tpu.core_type<tc>, window_params = [{transform_indices = @transform_0, window_bounds = array<i64: 16, 32>}, {transform_indices = @transform_1, window_bounds = array<i64: 16, 32>}, {pipeline_mode = #tpu.pipeline_mode<synchronous>, transform_indices = @transform_2, window_bounds = array<i64: 32, 128>}, {transform_indices = @transform_3, window_bounds = array<i64: 16, 32>}]} {
    %c0 = arith.constant 0 : index
    %c0_0 = arith.constant 0 : index
    %0 = vector.load %arg1[%c0, %c0_0] : memref<16x32xf32, #tpu.memory_space<vmem>>, vector<16x32xf32>
    %c0_1 = arith.constant 0 : index
    %c0_2 = arith.constant 0 : index
    %1 = vector.load %arg2[%c0_1, %c0_2] : memref<16x32xf32, #tpu.memory_space<vmem>>, vector<16x32xf32>
    %2 = arith.subf %1, %0 : vector<16x32xf32>
    %c0_3 = arith.constant 0 : index
    %c0_4 = arith.constant 0 : index
    %3 = vector.load %arg3[%c0_3, %c0_4] : memref<32x128xf32, #tpu.memory_space<vmem>>, vector<32x128xf32>
    %cst = arith.constant dense<0.000000e+00> : vector<16x128xf32>
    %4 = tpu.matmul %2, %3, %cst {dimension_numbers = #tpu.dot_dimension_numbers<[1], [0], [0], [1], [0, 0, 1, 1], [], []>} : vector<16x32xf32>, vector<32x128xf32>, vector<16x128xf32> -> vector<16x128xf32>
    %cst_5 = arith.constant dense<0.000000e+00> : vector<16x32xf32>
    %5 = tpu.matmul %4, %3, %cst_5 {dimension_numbers = #tpu.dot_dimension_numbers<[1], [1], [0], [0], [0, 0, 1, 0], [], []>} : vector<16x128xf32>, vector<32x128xf32>, vector<16x32xf32> -> vector<16x32xf32>
    %6 = arith.addf %0, %5 : vector<16x32xf32>
    %c0_6 = arith.constant 0 : index
    %c0_7 = arith.constant 0 : index
    %7 = vector.load %arg4[%c0_6, %c0_7] : memref<16x32xf32, #tpu.memory_space<vmem>>, vector<16x32xf32>
    tpu.vector_store %arg4[%c0_6, %c0_7], %6 {strides = array<i32>} : memref<16x32xf32, #tpu.memory_space<vmem>>, vector<16x32xf32>,
    return
  }
  func.func @transform_0(%arg0: i32) -> (i32, i32) {
    %c0_i32 = arith.constant 0 : i32
    %c0_i32_0 = arith.constant 0 : i32
    return %arg0, %c0_i32 : i32, i32
  }
  func.func @transform_1(%arg0: i32) -> (i32, i32) {
    %c0_i32 = arith.constant 0 : i32
    %c0_i32_0 = arith.constant 0 : i32
    return %arg0, %c0_i32 : i32, i32
  }
  func.func @transform_2(%arg0: i32) -> (i32, i32) {
    %c0_i32 = arith.constant 0 : i32
    %c0_i32_0 = arith.constant 0 : i32
    %c0_i32_1 = arith.constant 0 : i32
    return %c0_i32, %c0_i32_0 : i32, i32
  }
  func.func @transform_3(%arg0: i32) -> (i32, i32) {
    %c0_i32 = arith.constant 0 : i32
    %c0_i32_0 = arith.constant 0 : i32
    return %arg0, %c0_i32 : i32, i32
  }
}

</mosaic_0001>

<llo_original>
// kernel: low_rank_rotated_space_intervention.1
$region0: #{low_rank_rotated_space_intervention.1}
  #allocation0 [shape = 'u32[]', space=smem, size = 0x4, offset = 0x4, fixed_abs, tag = 'smem constant byte address 0x4 - core index']
  #allocation1 [shape = 'u32[144,128]{1,0:T(1,128)}', space=vmem, size = 0x12000, scoped, tag = 'internal scratch']
  %s0 = inlined_call_operand.vmem [shape: f32[16,32], index: 0, kind: input, shape index: {}]
  %s1 = inlined_call_operand.vmem [shape: f32[16,32], index: 1, kind: input, shape index: {}]
  %s2 = inlined_call_operand.vmem [shape: f32[32,128], index: 2, kind: input, shape index: {}]
  %s3 = inlined_call_operand.hbm [shape: f32[16,32], index: 3, kind: output, shape index: {}]
  %s4 = sld [smem:[#allocation0]]
  $region22: #{low_rank_rotated_space_intervention.1} parent=0
    _
  %s6 = ssub.s32 1, %s4
  %s7 = scalar_select 0, %s6, %s4
  $region1: #{low_rank_rotated_space_intervention.1} parent=0
    #allocation2 [shape = 'u8[8192]{0}', space=vmem, size = 0x2000, scoped, tag = 'output window, operand 0, single buffered']
    #allocation3 [shape = 's32[1]{0}', space=sflag, size = 0x4, scoped, tag = 'scoped memory for low_rank_rotated_space_intervention.1']
    %8 = vsyncpa [#allocation3], 0
    // Predicated region
    $region2: #{low_rank_rotated_space_intervention.1} parent=1 // pred_check
      _
    $region3: #{low_rank_rotated_space_intervention.1} parent=1 // pred_check_branch
      %10 = sbr.rel (0) target = $region5
    $region4: #{low_rank_rotated_space_intervention.1} parent=1 // pred_region
      _
    $region5: #{low_rank_rotated_space_intervention.1} parent=1 // pred_fallthru
      _
    // Predicated region
    $region6: #{low_rank_rotated_space_intervention.1} parent=1 // pred_check
      _
    $region7: #{low_rank_rotated_space_intervention.1} parent=1 // pred_check_branch
      %12 = sbr.rel (0) target = $region9
    $region8: #{low_rank_rotated_space_intervention.1} parent=1 // pred_region
      _
    $region9: #{low_rank_rotated_space_intervention.1} parent=1 // pred_fallthru
      _
    // Predicated region
    $region10: #{low_rank_rotated_space_intervention.1} parent=1 // pred_check
      _
    $region11: #{low_rank_rotated_space_intervention.1} parent=1 // pred_check_branch
      %14 = sbr.rel (0) target = $region13
    $region12: #{low_rank_rotated_space_intervention.1} parent=1 // pred_region
      _
    $region13: #{low_rank_rotated_space_intervention.1} parent=1 // pred_fallthru
      _
    %v15 = vld [vmem:[%s0] sm:$0xff]
    %v16 = vld [vmem:[%s0 + $0x8] sm:$0xff]
    %v17 = vld [vmem:[%s1] sm:$0xff]
    %v18 = vld [vmem:[%s1 + $0x8] sm:$0xff]
    %v19 = vsub.f32 %v17, %v15
    %v20 = vsub.f32 %v18, %v16
    %v21 = vld [vmem:[%s2] sm:$0xff]
    %v22 = vld [vmem:[%s2 + $0x8] sm:$0xff]
    %v23 = vld [vmem:[%s2 + $0x10] sm:$0xff]
    %v24 = vld [vmem:[%s2 + $0x18] sm:$0xff]
    %vm25 = vcmask 261120
    %v27 = vsel %vm25, %v19, 0
    %v30 = vsel %vm25, %v20, 0
    %32 = vmatprep.subr.mxu0 0.0
    %33 = vmatpush1.msra.mxu0 %v21
    %34 = vmatprep.subr.mxu0 0.0
    %35 = vmatpush1.msra.mxu0 %v22
    %36 = vmatprep.subr.mxu0 0.0
    %37 = vmatpush1.msra.mxu0 %v23
    %38 = vmatprep.subr.mxu0 0.0
    %39 = vmatpush1.msra.mxu0 %v24
    %40 = vmatprep.subr.mxu0 0.0
    %41 = vmatpush1.msra.mxu0 0.0
    %42 = vmatprep.subr.mxu0 0.0
    %43 = vmatpush1.msra.mxu0 0.0
    %44 = vmatprep.subr.mxu0 0.0
    %45 = vmatpush1.msra.mxu0 0.0
    %46 = vmatprep.subr.mxu0 0.0
    %47 = vmatpush1.msra.mxu0 0.0
    %48 = vmatprep.subr.mxu0 0.0
    %49 = vmatpush1.msra.mxu0 0.0
    %50 = vmatprep.subr.mxu0 0.0
    %51 = vmatpush1.msra.mxu0 0.0
    %52 = vmatprep.subr.mxu0 0.0
    %53 = vmatpush1.msra.mxu0 0.0
    %54 = vmatprep.subr.mxu0 0.0
    %55 = vmatpush1.msra.mxu0 0.0
    %56 = vmatprep.subr.mxu0 0.0
    %57 = vmatpush1.msra.mxu0 0.0
    %58 = vmatprep.subr.mxu0 0.0
    %59 = vmatpush1.msra.mxu0 0.0
    %60 = vmatprep.subr.mxu0 0.0
    %61 = vmatpush1.msra.mxu0 0.0
    %62 = vmatprep.subr.mxu0 0.0
    %63 = vmatpush1.msra.mxu0 0.0
    %64 = vmatprep.subr.mxu0 0.0
    %65 = vmatpush1.msra.mxu0 0.0
    %66 = vmatprep.subr.mxu0 0.0
    %67 = vmatpush1.msra.mxu0 0.0
    %68 = vmatprep.subr.mxu0 0.0
    %69 = vmatpush1.msra.mxu0 0.0
    %70 = vmatprep.subr.mxu0 0.0
    %71 = vmatpush1.msra.mxu0 0.0
    %72 = vmatprep.subr.mxu0 0.0
    %73 = vmatpush1.msra.mxu0 0.0
    %74 = vmatprep.subr.mxu0 0.0
    %75 = vmatpush1.msra.mxu0 0.0
    %76 = vmatprep.subr.mxu0 0.0
    %77 = vmatpush1.msra.mxu0 0.0
    %78 = vmatprep.subr.mxu0 0.0
    %79 = vmatpush1.msra.mxu0 0.0
    %80 = vmatprep.subr.mxu0 0.0
    %81 = vmatpush1.msra.mxu0 0.0
    %82 = vmatprep.subr.mxu0 0.0
    %83 = vmatpush1.msra.mxu0 0.0
    %84 = vmatprep.subr.mxu0 0.0
    %85 = vmatpush1.msra.mxu0 0.0
    %86 = vmatprep.subr.mxu0 0.0
    %87 = vmatpush1.msra.mxu0 0.0
    %88 = vmatprep.subr.mxu0 0.0
    %89 = vmatpush1.msra.mxu0 0.0
    %90 = vmatprep.subr.mxu0 0.0
    %91 = vmatpush1.msra.mxu0 0.0
    %92 = vmatprep.subr.mxu0 0.0
    %93 = vmatpush1.msra.mxu0 0.0
    %94 = vmatprep.subr.mxu0 0.0
    %95 = vmatpush1.msra.mxu0 0.0
    %96 = vmatprep.mubr.f32.mxu0 0.0
    %97 = vmatmul.mubr.f32.gmra.mrb[0].mxu0 %v27
    %v98 = vpop.f32.mrb[0].mxu0
    %v99 = vadd.f32 0.0, %v98
    %v100 = vpop.f32.mrb[0].mxu0
    %101 = vmatprep.mubr.f32.mxu0 0.0
    %102 = vmatmul.mubr.f32.gmra.mrb[0].mxu0 %v30
    %v103 = vpop.f32.mrb[0].mxu0
    %v104 = vadd.f32 0.0, %v103
    %v105 = vpop.f32.mrb[0].mxu0
    %106 = vdwg.mxu0
    %107 = vmatprep.subr.mxu0 0.0
    %108 = vmatpush1.xpose.msra.mxu0 %v21
    %109 = vmatprep.subr.mxu0 0.0
    %110 = vmatpush1.xpose.msra.mxu0 %v22
    %111 = vmatprep.subr.mxu0 0.0
    %112 = vmatpush1.xpose.msra.mxu0 %v23
    %113 = vmatprep.subr.mxu0 0.0
    %114 = vmatpush1.xpose.msra.mxu0 %v24
    %115 = vmatprep.subr.mxu0 0.0
    %116 = vmatpush1.xpose.msra.mxu0 0.0
    %117 = vmatprep.subr.mxu0 0.0
    %118 = vmatpush1.xpose.msra.mxu0 0.0
    %119 = vmatprep.subr.mxu0 0.0
    %120 = vmatpush1.xpose.msra.mxu0 0.0
    %121 = vmatprep.subr.mxu0 0.0
    %122 = vmatpush1.xpose.msra.mxu0 0.0
    %123 = vmatprep.subr.mxu0 0.0
    %124 = vmatpush1.xpose.msra.mxu0 0.0
    %125 = vmatprep.subr.mxu0 0.0
    %126 = vmatpush1.xpose.msra.mxu0 0.0
    %127 = vmatprep.subr.mxu0 0.0
    %128 = vmatpush1.xpose.msra.mxu0 0.0
    %129 = vmatprep.subr.mxu0 0.0
    %130 = vmatpush1.xpose.msra.mxu0 0.0
    %131 = vmatprep.subr.mxu0 0.0
    %132 = vmatpush1.xpose.msra.mxu0 0.0
    %133 = vmatprep.subr.mxu0 0.0
    %134 = vmatpush1.xpose.msra.mxu0 0.0
    %135 = vmatprep.subr.mxu0 0.0
    %136 = vmatpush1.xpose.msra.mxu0 0.0
    %137 = vmatprep.subr.mxu0 0.0
    %138 = vmatpush1.xpose.msra.mxu0 0.0
    %139 = vmatprep.subr.mxu0 0.0
    %140 = vmatpush1.xpose.msra.mxu0 0.0
    %141 = vmatprep.subr.mxu0 0.0
    %142 = vmatpush1.xpose.msra.mxu0 0.0
    %143 = vmatprep.subr.mxu0 0.0
    %144 = vmatpush1.xpose.msra.mxu0 0.0
    %145 = vmatprep.subr.mxu0 0.0
    %146 = vmatpush1.xpose.msra.mxu0 0.0
    %147 = vmatprep.subr.mxu0 0.0
    %148 = vmatpush1.xpose.msra.mxu0 0.0
    %149 = vmatprep.subr.mxu0 0.0
    %150 = vmatpush1.xpose.msra.mxu0 0.0
    %151 = vmatprep.subr.mxu0 0.0
    %152 = vmatpush1.xpose.msra.mxu0 0.0
    %153 = vmatprep.subr.mxu0 0.0
    %154 = vmatpush1.xpose.msra.mxu0 0.0
    %155 = vmatprep.subr.mxu0 0.0
    %156 = vmatpush1.xpose.msra.mxu0 0.0
    %157 = vmatprep.subr.mxu0 0.0
    %158 = vmatpush1.xpose.msra.mxu0 0.0
    %159 = vmatprep.subr.mxu0 0.0
    %160 = vmatpush1.xpose.msra.mxu0 0.0
    %161 = vmatprep.subr.mxu0 0.0
    %162 = vmatpush1.xpose.msra.mxu0 0.0
    %163 = vmatprep.subr.mxu0 0.0
    %164 = vmatpush1.xpose.msra.mxu0 0.0
    %165 = vmatprep.subr.mxu0 0.0
    %166 = vmatpush1.xpose.msra.mxu0 0.0
    %167 = vmatprep.subr.mxu0 0.0
    %168 = vmatpush1.xpose.msra.mxu0 0.0
    %169 = vmatprep.subr.mxu0 0.0
    %170 = vmatpush1.xpose.msra.mxu0 0.0
    %171 = vmatprep.mubr.f32.mxu0 0.0
    %172 = vmatmul.mubr.f32.gmra.mrb[0].mxu0 %v99
    %v173 = vpop.f32.mrb[0].mxu0
    %v174 = vadd.f32 0.0, %v173
    %v175 = vpop.f32.mrb[0].mxu0
    %176 = vmatprep.mubr.f32.mxu0 0.0
    %177 = vmatmul.mubr.f32.gmra.mrb[0].mxu0 %v104
    %v178 = vpop.f32.mrb[0].mxu0
    %v179 = vadd.f32 0.0, %v178
    %v180 = vpop.f32.mrb[0].mxu0
    %181 = vdwg.mxu0
    %v182 = vadd.f32 %v15, %v174
    %v183 = vadd.f32 %v16, %v179
    %184 = vst.msk [vmem:[#allocation2] sm:$0xff] %vm25, %v182
    %185 = vst.msk [vmem:[#allocation2 + $0x8] sm:$0xff] %vm25, %v183
    // Predicated region
    $region14: #{low_rank_rotated_space_intervention.1} parent=1 // pred_check
      _
    $region15: #{low_rank_rotated_space_intervention.1} parent=1 // pred_check_branch
      %187 = sbr.rel (0) target = $region17
    $region16: #{low_rank_rotated_space_intervention.1} parent=1 // pred_region
      %s189 = ssub.s32 256, 256
      %190 = vsyncadd [#allocation3], %s189
      %s191 = sshll.u32 [#allocation2], 4
      %s192 = int_to_ptr.vmem [resolvable:$true] %s191
      %197 = dma.vmem_to_hbm [thread:$0]  %s192, 256, %s3, [#allocation3], 128, 128, 8
    $region17: #{low_rank_rotated_space_intervention.1} parent=1 // pred_fallthru
      _
    // Predicated region
    $region18: #{low_rank_rotated_space_intervention.1} parent=1 // pred_check
      _
    $region19: #{low_rank_rotated_space_intervention.1} parent=1 // pred_check_branch
      %199 = sbr.rel (0) target = $region21
    $region20: #{low_rank_rotated_space_intervention.1} parent=1 // pred_region
      %200 = dma.done [#allocation3], 256
    $region21: #{low_rank_rotated_space_intervention.1} parent=1 // pred_fallthru
      _
    %201 = vsyncpa [#allocation3], 1

</llo_original>
